<compile_context>
chip_gen: v7x
topology: tpu7x:2x2x1
jax: 0.10.0
libtpu: 0.0.40
codegen_flags: <defaults>
</compile_context>

<pallas_src>
import functools

import jax
import jax.numpy as jnp
from jax.experimental import pallas as pl
from jax.experimental.pallas import tpu as pltpu

K = 4          # kernel size
STRIDE = 2
PAD = 1
EPS = 1e-5     # InstanceNorm2d default eps


def _upconv_in_relu_kernel(cols_ref, w_ref, o_ref, *, hw_valid, cout):
    """One sample per grid step.

    cols_ref: (1, 9*Cin, HWp)   shared 9-tap im2col slab (matmul dtype), HWp on lanes
    w_ref   : (4*Cout, 9*Cin)   merged per-phase weights (matmul dtype), grid-invariant
    o_ref   : (1, 4*Cout, HWp)  per-phase InstanceNorm+ReLU output (f32), lane-dense
    """
    # Single MXU matmul covering all 4 output parity phases; f32 accumulation.
    y = jnp.dot(w_ref[...], cols_ref[0], preferred_element_type=jnp.float32)

    # Park the raw conv result in the output block (no separate VMEM scratch); the
    # normalize pass below overwrites it in place before the output DMA.
    o_ref[0] = y.astype(o_ref.dtype)

    # Per-(phase, channel) sums / sums-of-squares over the lane (spatial) axis.
    s = jnp.sum(y, axis=1, keepdims=True)        # (4*Cout, 1) f32
    sq = jnp.sum(y * y, axis=1, keepdims=True)   # (4*Cout, 1) f32

    # Fold the 4 phase row-groups -> per-channel stats over the FULL OHxOW extent.
    s_c = s[0:cout] + s[cout:2 * cout] + s[2 * cout:3 * cout] + s[3 * cout:4 * cout]
    sq_c = sq[0:cout] + sq[cout:2 * cout] + sq[2 * cout:3 * cout] + sq[3 * cout:4 * cout]

    # Zero-padded lanes contribute 0 (no bias), so dividing by the true count is exact.
    inv_n = 1.0 / float(4 * hw_valid)
    mean = s_c * inv_n
    var = sq_c * inv_n - mean * mean             # one-pass variance, f32 accumulators
    inv_std = jax.lax.rsqrt(var + EPS)

    mean4 = jnp.concatenate([mean, mean, mean, mean], axis=0)              # (4*Cout, 1)
    inv_std4 = jnp.concatenate([inv_std, inv_std, inv_std, inv_std], axis=0)

    # Pass 2: normalize + ReLU, single lane-dense store.
    y2 = o_ref[0].astype(jnp.float32)
    o_ref[0] = jnp.maximum((y2 - mean4) * inv_std4, 0.0).astype(o_ref.dtype)


def _merged_weights(weight, matmul_dtype):
    """weight: (Cin, Cout, 4, 4) PyTorch ConvTranspose2d layout ->
    (4*Cout, 9*Cin) merged matmul LHS. Row block p = 2*(oh%2) + (ow%2); column block
    t = 3*sh + sw addresses the shared tap xp[:, :, sh:sh+H, sw:sw+W]; unused taps are 0."""
    cin, cout = weight.shape[0], weight.shape[1]
    zeros = jnp.zeros((cout, cin), weight.dtype)
    rows = []
    for ph in range(2):
        for pw in range(2):
            taps = []
            for sh in range(3):
                for sw in range(3):
                    if sh in (ph, ph + 1) and sw in (pw, pw + 1):
                        kh = 3 + ph - 2 * sh
                        kw = 3 + pw - 2 * sw
                        taps.append(weight[:, :, kh, kw].T)      # (Cout, Cin)
                    else:
                        taps.append(zeros)
            rows.append(jnp.concatenate(taps, axis=1))           # (Cout, 9*Cin)
    return jnp.concatenate(rows, axis=0).astype(matmul_dtype)    # (4*Cout, 9*Cin)


def _shared_cols(x_nchw, hw_p, matmul_dtype):
    """x: (N, Cin, H, W) -> (N, 9*Cin, HWp) shared 3x3 im2col slab (strided slices only),
    tap index t = 3*sh + sw, zero-padded on the lane axis up to HWp."""
    n, cin, h, w = x_nchw.shape
    hw = h * w
    xp = jnp.pad(x_nchw, ((0, 0), (0, 0), (1, 1), (1, 1)))
    taps = []
    for sh in range(3):
        for sw in range(3):
            taps.append(xp[:, :, sh:sh + h, sw:sw + w].reshape(n, cin, hw))
    cols = jnp.concatenate(taps, axis=1).astype(matmul_dtype)    # (N, 9*Cin, HW)
    if hw_p > hw:
        cols = jnp.pad(cols, ((0, 0), (0, 0), (0, hw_p - hw)))
    return cols


@functools.partial(jax.jit, static_argnames=("matmul_dtype",))
def upconv_block(x_nchw, enc_ip_nchw, weight, matmul_dtype=jnp.bfloat16):
    """x_nchw: (N, Cin, H, W); enc_ip_nchw: (N, Cenc, 2H, 2W);
    weight: (Cin, Cout, 4, 4) PyTorch ConvTranspose2d layout (bias omitted: it cancels
    under affine-less InstanceNorm). Returns (N, Cout + Cenc, 2H, 2W) NCHW."""
    n, cin, h, w = x_nchw.shape
    cout = weight.shape[1]
    oh, ow = STRIDE * h, STRIDE * w
    hw = h * w
    hw_p = ((hw + 127) // 128) * 128          # lane-dense stores

    cols = _shared_cols(x_nchw, hw_p, matmul_dtype)   # (N, 9*Cin, HWp)
    wm = _merged_weights(weight, matmul_dtype)        # (4*Cout, 9*Cin)

    # Raise the scoped-VMEM limit if whole-sample blocks need it (v5e/v6e); clamp to the
    # v7x physical 64 MiB — beyond that, HW tiling (see TODO) is required anyway.
    itm = jnp.dtype(matmul_dtype).itemsize
    ito = jnp.dtype(x_nchw.dtype).itemsize
    need = (2 * (9 * cin * hw_p * itm + 4 * cout * hw_p * ito)
            + 2 * (4 * cout * 9 * cin * itm) + (2 << 20))
    vmem_limit = int(min(max(need, 32 * 1024 * 1024), 64 * 1024 * 1024))

    y_ph = pl.pallas_call(
        functools.partial(_upconv_in_relu_kernel, hw_valid=hw, cout=cout),
        out_shape=jax.ShapeDtypeStruct((n, 4 * cout, hw_p), x_nchw.dtype),
        grid_spec=pltpu.PrefetchScalarGridSpec(
            num_scalar_prefetch=0,
            grid=(n,),
            in_specs=[
                pl.BlockSpec((1, 9 * cin, hw_p), lambda i: (i, 0, 0)),
                pl.BlockSpec((4 * cout, 9 * cin), lambda i: (0, 0)),
            ],
            out_specs=pl.BlockSpec((1, 4 * cout, hw_p), lambda i: (i, 0, 0)),
        ),
        compiler_params=pltpu.CompilerParams(
            dimension_semantics=("parallel",),
            vmem_limit_bytes=vmem_limit,
        ),
    )(cols, wm)

    # Phase -> pixel interleave: row p*Cout+co of y_ph holds out[co, 2r+ph, 2c+pw] with
    # p = 2*ph + pw. (See TODO at top: fold this + the concat into the kernel's stores.)
    y = y_ph[..., :hw].reshape(n, 2, 2, cout, h, w)
    y = jnp.transpose(y, (0, 3, 4, 1, 5, 2)).reshape(n, cout, oh, ow)
    return jnp.concatenate([y, enc_ip_nchw], axis=1)


def _reference(x_nchw, enc_ip_nchw, weight, bias):
    """Pure-JAX reference (with the conv bias) using lax.conv_general_dilated."""
    cout = weight.shape[1]
    wc = jnp.transpose(weight[:, :, ::-1, ::-1], (1, 0, 2, 3))     # OIHW, spatially flipped
    y = jax.lax.conv_general_dilated(
        x_nchw, wc, window_strides=(1, 1),
        padding=[(K - 1 - PAD, K - 1 - PAD)] * 2,
        lhs_dilation=(STRIDE, STRIDE),
        dimension_numbers=("NCHW", "OIHW", "NCHW"))
    y = y + bias.reshape(1, cout, 1, 1)
    mean = jnp.mean(y, axis=(2, 3), keepdims=True)
    var = jnp.mean((y - mean) ** 2, axis=(2, 3), keepdims=True)
    y = jnp.maximum((y - mean) * jax.lax.rsqrt(var + EPS), 0.0)
    return jnp.concatenate([y, enc_ip_nchw], axis=1)


if __name__ == "__main__":
    key = jax.random.PRNGKey(0)
    k_x, k_e, k_w, k_b = jax.random.split(key, 4)

    N, CIN, COUT, H, W = 2, 4, 4, 16, 16          # output spatial 32x32, H*W = 256 lanes
    x = jax.random.normal(k_x, (N, CIN, H, W), jnp.float32)
    enc_ip = jax.random.normal(k_e, (N, COUT, 2 * H, 2 * W), jnp.float32)

    fan = CIN * K * K
    bound = 1.0 / (fan ** 0.5)
    weight = jax.random.uniform(k_w, (CIN, COUT, K, K), jnp.float32, -bound, bound)
    bias = jax.random.uniform(k_b, (COUT,), jnp.float32, -bound, bound)

    ref = jax.block_until_ready(_reference(x, enc_ip, weight, bias))

    # Tight check (f32 matmul path): also proves the dropped conv bias cancels exactly
    # under affine-less InstanceNorm (the reference keeps the bias).
    out_f32 = jax.block_until_ready(
        upconv_block(x, enc_ip, weight, matmul_dtype=jnp.float32))
    assert out_f32.shape == (N, COUT + COUT, 2 * H, 2 * W), out_f32.shape
    err32 = float(jnp.max(jnp.abs(out_f32 - ref)))
    assert jnp.allclose(out_f32, ref, atol=1e-4, rtol=1e-4), err32

    # Production path: bf16 matmul operands, f32 accumulation / statistics.
    out_bf16 = jax.block_until_ready(
        upconv_block(x, enc_ip, weight, matmul_dtype=jnp.bfloat16))
    assert out_bf16.shape == (N, COUT + COUT, 2 * H, 2 * W), out_bf16.shape
    err16 = float(jnp.max(jnp.abs(out_bf16 - ref)))
    assert jnp.allclose(out_bf16, ref, atol=5e-2, rtol=5e-2), err16

    print("KERNEL_OK")
</pallas_src>

<mosaic_0001>
module attributes {stable_mosaic.version = 11 : i64} {
  func.func @_upconv_in_relu_kernel(%arg0: i32, %arg1: memref<1x36x256xf32, #tpu.memory_space<vmem>>, %arg2: memref<16x36xf32, #tpu.memory_space<vmem>>, %arg3: memref<1x16x256xf32, #tpu.memory_space<vmem>>) attributes {dimension_semantics = [#tpu.dimension_semantics<parallel>], iteration_bounds = array<i64: 2>, scalar_prefetch = 0 : i64, scratch_operands = 0 : i64, tpu.core_type = #tpu.core_type<tc>, window_params = [{transform_indices = @transform_0, window_bounds = array<i64: 1, 36, 256>}, {pipeline_mode = #tpu.pipeline_mode<synchronous>, transform_indices = @transform_1, window_bounds = array<i64: 16, 36>}, {transform_indices = @transform_2, window_bounds = array<i64: 1, 16, 256>}]} {
    %c0 = arith.constant 0 : index
    %c0_0 = arith.constant 0 : index
    %0 = vector.load %arg2[%c0, %c0_0] : memref<16x36xf32, #tpu.memory_space<vmem>>, vector<16x36xf32>
    %c0_1 = arith.constant 0 : index
    %c0_2 = arith.constant 0 : index
    %c0_3 = arith.constant 0 : index
    %1 = vector.load %arg1[%c0_1, %c0_2, %c0_3] : memref<1x36x256xf32, #tpu.memory_space<vmem>>, vector<1x36x256xf32>
    %2 = vector.shape_cast %1 : vector<1x36x256xf32> to vector<36x256xf32>
    %cst = arith.constant dense<0.000000e+00> : vector<16x256xf32>
    %3 = tpu.matmul %0, %2, %cst {dimension_numbers = #tpu.dot_dimension_numbers<[1], [0], [0], [1], [0, 0, 1, 1], [], []>} : vector<16x36xf32>, vector<36x256xf32>, vector<16x256xf32> -> vector<16x256xf32>
    %c0_4 = arith.constant 0 : index
    %c0_5 = arith.constant 0 : index
    %c0_6 = arith.constant 0 : index
    %4 = vector.load %arg3[%c0_4, %c0_5, %c0_6] : memref<1x16x256xf32, #tpu.memory_space<vmem>>, vector<1x16x256xf32>
    %5 = vector.shape_cast %4 : vector<1x16x256xf32> to vector<16x256xf32>
    %6 = vector.shape_cast %3 : vector<16x256xf32> to vector<1x16x256xf32>
    tpu.vector_store %arg3[%c0_4, %c0_5, %c0_6], %6 {strides = array<i32>} : memref<1x16x256xf32, #tpu.memory_space<vmem>>, vector<1x16x256xf32>,
    %cst_7 = arith.constant dense<0.000000e+00> : vector<16xf32>
    %7 = vector.multi_reduction <add>, %3, %cst_7 [1] : vector<16x256xf32> to vector<16xf32>
    %8 = vector.shape_cast %7 : vector<16xf32> to vector<16x1xf32>
    %9 = arith.mulf %3, %3 : vector<16x256xf32>
    %cst_8 = arith.constant dense<0.000000e+00> : vector<16xf32>
    %10 = vector.multi_reduction <add>, %9, %cst_8 [1] : vector<16x256xf32> to vector<16xf32>
    %11 = vector.shape_cast %10 : vector<16xf32> to vector<16x1xf32>
    %12 = vector.extract_strided_slice %8 {offsets = [0, 0], sizes = [4, 1], strides = [1, 1]} : vector<16x1xf32> to vector<4x1xf32>
    %13 = vector.extract_strided_slice %8 {offsets = [4, 0], sizes = [4, 1], strides = [1, 1]} : vector<16x1xf32> to vector<4x1xf32>
    %14 = arith.addf %12, %13 : vector<4x1xf32>
    %15 = vector.extract_strided_slice %8 {offsets = [8, 0], sizes = [4, 1], strides = [1, 1]} : vector<16x1xf32> to vector<4x1xf32>
    %16 = arith.addf %14, %15 : vector<4x1xf32>
    %17 = vector.extract_strided_slice %8 {offsets = [12, 0], sizes = [4, 1], strides = [1, 1]} : vector<16x1xf32> to vector<4x1xf32>
    %18 = arith.addf %16, %17 : vector<4x1xf32>
    %19 = vector.extract_strided_slice %11 {offsets = [0, 0], sizes = [4, 1], strides = [1, 1]} : vector<16x1xf32> to vector<4x1xf32>
    %20 = vector.extract_strided_slice %11 {offsets = [4, 0], sizes = [4, 1], strides = [1, 1]} : vector<16x1xf32> to vector<4x1xf32>
    %21 = arith.addf %19, %20 : vector<4x1xf32>
    %22 = vector.extract_strided_slice %11 {offsets = [8, 0], sizes = [4, 1], strides = [1, 1]} : vector<16x1xf32> to vector<4x1xf32>
    %23 = arith.addf %21, %22 : vector<4x1xf32>
    %24 = vector.extract_strided_slice %11 {offsets = [12, 0], sizes = [4, 1], strides = [1, 1]} : vector<16x1xf32> to vector<4x1xf32>
    %25 = arith.addf %23, %24 : vector<4x1xf32>
    %cst_9 = arith.constant 9.765625E-4 : f32
    %26 = vector.broadcast %cst_9 : f32 to vector<4x1xf32>
    %27 = arith.mulf %18, %26 : vector<4x1xf32>
    %cst_10 = arith.constant 9.765625E-4 : f32
    %28 = vector.broadcast %cst_10 : f32 to vector<4x1xf32>
    %29 = arith.mulf %25, %28 : vector<4x1xf32>
    %30 = arith.mulf %27, %27 : vector<4x1xf32>
    %31 = arith.subf %29, %30 : vector<4x1xf32>
    %cst_11 = arith.constant 9.99999974E-6 : f32
    %32 = vector.broadcast %cst_11 : f32 to vector<4x1xf32>
    %33 = arith.addf %31, %32 : vector<4x1xf32>
    %34 = math.rsqrt %33 : vector<4x1xf32>
    %35 = tpu.concatenate %27, %27, %27, %27 in 0 : vector<4x1xf32>, vector<4x1xf32>, vector<4x1xf32>, vector<4x1xf32> -> vector<16x1xf32>
    %36 = tpu.concatenate %34, %34, %34, %34 in 0 : vector<4x1xf32>, vector<4x1xf32>, vector<4x1xf32>, vector<4x1xf32> -> vector<16x1xf32>
    %c0_12 = arith.constant 0 : index
    %c0_13 = arith.constant 0 : index
    %c0_14 = arith.constant 0 : index
    %37 = vector.load %arg3[%c0_12, %c0_13, %c0_14] : memref<1x16x256xf32, #tpu.memory_space<vmem>>, vector<1x16x256xf32>
    %38 = vector.shape_cast %37 : vector<1x16x256xf32> to vector<16x256xf32>
    %39 = vector.broadcast %35 : vector<16x1xf32> to vector<16x256xf32>
    %40 = arith.subf %38, %39 : vector<16x256xf32>
    %41 = vector.broadcast %36 : vector<16x1xf32> to vector<16x256xf32>
    %42 = arith.mulf %40, %41 : vector<16x256xf32>
    %cst_15 = arith.constant 0.000000e+00 : f32
    %43 = vector.broadcast %cst_15 : f32 to vector<16x256xf32>
    %44 = arith.maximumf %42, %43 : vector<16x256xf32>
    %c0_16 = arith.constant 0 : index
    %c0_17 = arith.constant 0 : index
    %c0_18 = arith.constant 0 : index
    %45 = vector.load %arg3[%c0_16, %c0_17, %c0_18] : memref<1x16x256xf32, #tpu.memory_space<vmem>>, vector<1x16x256xf32>
    %46 = vector.shape_cast %45 : vector<1x16x256xf32> to vector<16x256xf32>
    %47 = vector.shape_cast %44 : vector<16x256xf32> to vector<1x16x256xf32>
    tpu.vector_store %arg3[%c0_16, %c0_17, %c0_18], %47 {strides = array<i32>} : memref<1x16x256xf32, #tpu.memory_space<vmem>>, vector<1x16x256xf32>,
    return
  }
  func.func @transform_0(%arg0: i32) -> (i32, i32, i32) {
    %c0_i32 = arith.constant 0 : i32
    %c0_i32_0 = arith.constant 0 : i32
    %c0_i32_1 = arith.constant 0 : i32
    return %arg0, %c0_i32, %c0_i32_0 : i32, i32, i32
  }
  func.func @transform_1(%arg0: i32) -> (i32, i32) {
    %c0_i32 = arith.constant 0 : i32
    %c0_i32_0 = arith.constant 0 : i32
    %c0_i32_1 = arith.constant 0 : i32
    return %c0_i32, %c0_i32_0 : i32, i32
  }
  func.func @transform_2(%arg0: i32) -> (i32, i32, i32) {
    %c0_i32 = arith.constant 0 : i32
    %c0_i32_0 = arith.constant 0 : i32
    %c0_i32_1 = arith.constant 0 : i32
    return %arg0, %c0_i32, %c0_i32_0 : i32, i32, i32
  }
}

</mosaic_0001>

<llo_original>
// kernel: upconv_block.1
$region0: #{upconv_block.1}
  #allocation0 [shape = 'u32[]', space=smem, size = 0x4, offset = 0x4, fixed_abs, tag = 'smem constant byte address 0x4 - core index']
  #allocation1 [shape = 'u32[144,128]{1,0:T(1,128)}', space=vmem, size = 0x12000, scoped, tag = 'internal scratch']
  %s0 = inlined_call_operand.vmem [shape: f32[2,36,256], index: 0, kind: input, shape index: {}]
  %s1 = inlined_call_operand.vmem [shape: f32[16,36], index: 1, kind: input, shape index: {}]
  %s2 = inlined_call_operand.vmem [shape: f32[2,16,256], index: 2, kind: output, shape index: {}]
  %s3 = sld [smem:[#allocation0]]
  $region41: #{upconv_block.1} parent=0
    _
  %s5 = ssub.s32 1, %s3
  %s6 = scalar_select 0, %s5, %s3
  loop: start=0, step=1, limit=4
  $region2: #{upconv_block.1} parent=0 // loop_pre_header
    _
  $region3: #{upconv_block.1} parent=0 // loop_header
    %s8 = sphi 0, %s12
    %p9 = scmp.ge.s32.totalorder %s8, 4
    %s18 = sphi 0, %s20
    %s21 = sphi 0, %s18
    %s22 = sphi 0, %s21
    %s38 = sphi 0, %s22
    %s42 = sphi 0, %s42
    %s44 = sphi 0, %s42
    %s45 = sphi 0, %s44
    %s59 = sphi 0, %s45
    %s65 = sphi 0, %s67
    %s68 = sphi 0, %s65
    %s69 = sphi 0, %s68
    %s85 = sphi 0, %s69
  $region4: #{upconv_block.1} parent=0 // loop_header_branch
    %11 = sbr.rel (%p9) target = $region8
  $region5: #{upconv_block.1} parent=0 // loop_body
    %s13 = ssub.s32 %s8, 1
    %s14 = ssub.s32 %s8, 2
    %s15 = sadd.s32 %s8, 1
    %s16 = ssub.s32 %s8, %s15
    %p17 = scmp.eq.s32.totalorder %s16, 0
    %s19 = sadd.s32 %s18, 1
    %s20 = scalar_select %p17, %s18, %s19
    %p23 = pneg %p17
    %p24 = scmp.eq.s32.totalorder %s8, 1
    %p25 = por %p23, %p24
    %p26 = scmp.ne.s32.totalorder %s18, %s21
    %p27 = scmp.eq.s32.totalorder %s8, 0
    %p28 = por %p26, %p27
    %p29 = scmp.ne.s32.totalorder %s18, %s21
    %p30 = scmp.eq.s32.totalorder %s13, 1
    %p31 = por %p29, %p30
    %p32 = scmp.ne.s32.totalorder %s21, %s22
    %p33 = scmp.eq.s32.totalorder %s13, 0
    %p34 = por %p32, %p33
    %p35 = scmp.ne.s32.totalorder %s21, %s22
    %p36 = scmp.eq.s32.totalorder %s14, 1
    %p37 = por %p35, %p36
    %p39 = scmp.ne.s32.totalorder %s22, %s38
    %p40 = scmp.eq.s32.totalorder %s14, 0
    %p41 = por %p39, %p40
    %s43 = sadd.s32 %s42, 1
    %p46 = scmp.eq.s32.totalorder %s8, 1
    %p47 = scmp.ne.s32.totalorder %s42, %s44
    %p48 = scmp.eq.s32.totalorder %s8, 0
    %p49 = por %p47, %p48
    %p50 = scmp.ne.s32.totalorder %s42, %s44
    %p51 = scmp.eq.s32.totalorder %s13, 1
    %p52 = por %p50, %p51
    %p53 = scmp.ne.s32.totalorder %s44, %s45
    %p54 = scmp.eq.s32.totalorder %s13, 0
    %p55 = por %p53, %p54
    %p56 = scmp.ne.s32.totalorder %s44, %s45
    %p57 = scmp.eq.s32.totalorder %s14, 1
    %p58 = por %p56, %p57
    %p60 = scmp.ne.s32.totalorder %s45, %s59
    %p61 = scmp.eq.s32.totalorder %s14, 0
    %p62 = por %p60, %p61
    %s63 = ssub.s32 %s8, %s15
    %p64 = scmp.eq.s32.totalorder %s63, 0
    %s66 = sadd.s32 %s65, 1
    %s67 = scalar_select %p64, %s65, %s66
    %p70 = pneg %p64
    %p71 = scmp.eq.s32.totalorder %s8, 1
    %p72 = por %p70, %p71
    %p73 = scmp.ne.s32.totalorder %s65, %s68
    %p74 = scmp.eq.s32.totalorder %s8, 0
    %p75 = por %p73, %p74
    %p76 = scmp.ne.s32.totalorder %s65, %s68
    %p77 = scmp.eq.s32.totalorder %s13, 1
    %p78 = por %p76, %p77
    %p79 = scmp.ne.s32.totalorder %s68, %s69
    %p80 = scmp.eq.s32.totalorder %s13, 0
    %p81 = por %p79, %p80
    %p82 = scmp.ne.s32.totalorder %s68, %s69
    %p83 = scmp.eq.s32.totalorder %s14, 1
    %p84 = por %p82, %p83
    %p86 = scmp.ne.s32.totalorder %s69, %s85
    %p87 = scmp.eq.s32.totalorder %s14, 0
    %p88 = por %p86, %p87
    %p89 = scmp.le.s32.totalorder 1, %s8
    %p90 = scmp.lt.s32.totalorder %s8, 3
    %p91 = pnand %p89, %p90
    %p92 = pneg %p91
    // Predicated region
    $region9: #{upconv_block.1} parent=5 // pred_check
      _
    $region10: #{upconv_block.1} parent=5 // pred_check_branch
      %94 = sbr.rel (%p91) target = $region12
    $region11: #{upconv_block.1} parent=5 // pred_region
      %s95 = ssub.s32 %s8, 1
      // Predicated region
      $region13: #{upconv_block.1} parent=11 // pred_check
        %p96 = pneg %p55
      $region14: #{upconv_block.1} parent=11 // pred_check_branch
        %98 = sbr.rel (%p96) target = $region16
      $region15: #{upconv_block.1} parent=11 // pred_region
        _
      $region16: #{upconv_block.1} parent=11 // pred_fallthru
        _
    $region12: #{upconv_block.1} parent=5 // pred_fallthru
      _
    %p99 = scmp.lt.s32.totalorder %s8, 2
    // Predicated region
    $region17: #{upconv_block.1} parent=5 // pred_check
      %p100 = pneg %p99
    $region18: #{upconv_block.1} parent=5 // pred_check_branch
      %102 = sbr.rel (%p100) target = $region20
    $region19: #{upconv_block.1} parent=5 // pred_region
      // Predicated region
      $region21: #{upconv_block.1} parent=19 // pred_check
        %p103 = pneg %p28
      $region22: #{upconv_block.1} parent=19 // pred_check_branch
        %105 = sbr.rel (%p103) target = $region24
      $region23: #{upconv_block.1} parent=19 // pred_region
        %p106 = scmp.lt.s32.totalorder %s8, 1
        %s107 = scalar_select %p106, %s8, 1
        %s108 = smul.addr %s107, 10
        %s109 = smul.addr %s108, 8
        %s110 = scalar_lea.vmem %s0, %s109
      $region24: #{upconv_block.1} parent=19 // pred_fallthru
        _
    $region20: #{upconv_block.1} parent=5 // pred_fallthru
      _
    %p111 = scmp.le.s32.totalorder 1, %s8
    %p112 = scmp.lt.s32.totalorder %s8, 3
    %p113 = pnand %p111, %p112
    %p114 = pneg %p113
    // Predicated region
    $region25: #{upconv_block.1} parent=5 // pred_check
      _
    $region26: #{upconv_block.1} parent=5 // pred_check_branch
      %116 = sbr.rel (%p113) target = $region28
    $region27: #{upconv_block.1} parent=5 // pred_region
      %s117 = ssub.s32 %s8, 1
      %p118 = scmp.lt.s32.totalorder %s13, 1
      %s119 = scalar_select %p118, %s13, 1
      %s120 = smul.addr %s119, 10
      %s121 = smul.addr %s120, 8
      %s122 = scalar_lea.vmem %s0, %s121
      %p123 = pneg %p34
      %p124 = pneg %p31
      %p125 = pneg %p55
      %p126 = pneg %p52
      %p127 = pneg %p81
      %p128 = pneg %p78
      %p129 = scmp.lt.s32.totalorder %s13, 1
      %s130 = scalar_select %p129, %s13, 1
      %s131 = smul.addr %s130, 4
      %s132 = smul.addr %s131, 8
      %s133 = scalar_lea.vmem %s2, %s132
      %p134 = scmp.lt.s32.totalorder %s13, 1
      %s135 = scalar_select %p134, %s13, 1
      %s136 = smul.addr %s135, 10
      %s137 = smul.addr %s136, 8
      %s138 = scalar_lea.vmem %s0, %s137
      %p139 = scmp.lt.s32.totalorder %s13, 1
      %s140 = scalar_select %p139, %s13, 1
      %s141 = smul.addr %s140, 4
      %s142 = smul.addr %s141, 8
      %s143 = scalar_lea.vmem %s2, %s142
      %v144 = vld [vmem:[%s1] sm:$0xff]
      %v145 = vld [vmem:[%s1 + $0x8] sm:$0xff]
      %v146 = vld [vmem:[%s138] sm:$0xff]
      %v147 = vld [vmem:[%s138 + $0x8] sm:$0xff]
      %v148 = vld [vmem:[%s138 + $0x10] sm:$0xff]
      %v149 = vld [vmem:[%s138 + $0x18] sm:$0xff]
      %v150 = vld [vmem:[%s138 + $0x20] sm:$0xff]
      %v151 = vld [vmem:[%s138 + $0x28] sm:$0xff]
      %v152 = vld [vmem:[%s138 + $0x30] sm:$0xff]
      %v153 = vld [vmem:[%s138 + $0x38] sm:$0xff]
      %v154 = vld [vmem:[%s138 + $0x40] sm:$0xf]
      %v155 = vld [vmem:[%s138 + $0x48] sm:$0xf]
      %vm156 = vcmask 293888
      %v158 = vsel %vm156, %v144, 0
      %v161 = vsel %vm156, %v145, 0
      %vm163 = vcmask 1043456
      %v165 = vsel %vm163, %v154, 0
      %v168 = vsel %vm163, %v155, 0
      %170 = vmatprep.subr.mxu0 %v147
      %171 = vmatpush1.msra.mxu0 %v146
      %172 = vmatprep.subr.mxu0 %v149
      %173 = vmatpush1.msra.mxu0 %v148
      %174 = vmatprep.subr.mxu0 %v151
      %175 = vmatpush1.msra.mxu0 %v150
      %176 = vmatprep.subr.mxu0 %v153
      %177 = vmatpush1.msra.mxu0 %v152
      %178 = vmatprep.subr.mxu0 %v168
      %179 = vmatpush1.msra.mxu0 %v165
      %180 = vmatprep.subr.mxu0 0.0
      %181 = vmatpush1.msra.mxu0 0.0
      %182 = vmatprep.subr.mxu0 0.0
      %183 = vmatpush1.msra.mxu0 0.0
      %184 = vmatprep.subr.mxu0 0.0
      %185 = vmatpush1.msra.mxu0 0.0
      %186 = vmatprep.subr.mxu0 0.0
      %187 = vmatpush1.msra.mxu0 0.0
      %188 = vmatprep.subr.mxu0 0.0
      %189 = vmatpush1.msra.mxu0 0.0
      %190 = vmatprep.subr.mxu0 0.0
      %191 = vmatpush1.msra.mxu0 0.0
      %192 = vmatprep.subr.mxu0 0.0
      %193 = vmatpush1.msra.mxu0 0.0
      %194 = vmatprep.subr.mxu0 0.0
      %195 = vmatpush1.msra.mxu0 0.0
      %196 = vmatprep.subr.mxu0 0.0
      %197 = vmatpush1.msra.mxu0 0.0
      %198 = vmatprep.subr.mxu0 0.0
      %199 = vmatpush1.msra.mxu0 0.0
      %200 = vmatprep.subr.mxu0 0.0
      %201 = vmatpush1.msra.mxu0 0.0
      %202 = vmatprep.subr.mxu0 0.0
      %203 = vmatpush1.msra.mxu0 0.0
      %204 = vmatprep.subr.mxu0 0.0
      %205 = vmatpush1.msra.mxu0 0.0
      %206 = vmatprep.subr.mxu0 0.0
      %207 = vmatpush1.msra.mxu0 0.0
      %208 = vmatprep.subr.mxu0 0.0
      %209 = vmatpush1.msra.mxu0 0.0
      %210 = vmatprep.subr.mxu0 0.0
      %211 = vmatpush1.msra.mxu0 0.0
      %212 = vmatprep.subr.mxu0 0.0
      %213 = vmatpush1.msra.mxu0 0.0
      %214 = vmatprep.subr.mxu0 0.0
      %215 = vmatpush1.msra.mxu0 0.0
      %216 = vmatprep.subr.mxu0 0.0
      %217 = vmatpush1.msra.mxu0 0.0
      %218 = vmatprep.subr.mxu0 0.0
      %219 = vmatpush1.msra.mxu0 0.0
      %220 = vmatprep.subr.mxu0 0.0
      %221 = vmatpush1.msra.mxu0 0.0
      %222 = vmatprep.subr.mxu0 0.0
      %223 = vmatpush1.msra.mxu0 0.0
      %224 = vmatprep.subr.mxu0 0.0
      %225 = vmatpush1.msra.mxu0 0.0
      %226 = vmatprep.subr.mxu0 0.0
      %227 = vmatpush1.msra.mxu0 0.0
      %228 = vmatprep.subr.mxu0 0.0
      %229 = vmatpush1.msra.mxu0 0.0
      %230 = vmatprep.subr.mxu0 0.0
      %231 = vmatpush1.msra.mxu0 0.0
      %232 = vmatprep.subr.mxu0 0.0
      %233 = vmatpush1.msra.mxu0 0.0
      %234 = vmatprep.mubr.f32.mxu0 0.0
      %235 = vmatmul.mubr.f32.gmra.mrb[0].mxu0 %v158
      %v236 = vpop.f32.mrb[0].mxu0
      %v237 = vadd.f32 0.0, %v236
      %v238 = vpop.f32.mrb[0].mxu0
      %v239 = vadd.f32 0.0, %v238
      %240 = vmatprep.mubr.f32.mxu0 0.0
      %241 = vmatmul.mubr.f32.gmra.mrb[0].mxu0 %v161
      %v242 = vpop.f32.mrb[0].mxu0
      %v243 = vadd.f32 0.0, %v242
      %v244 = vpop.f32.mrb[0].mxu0
      %v245 = vadd.f32 0.0, %v244
      %246 = vdwg.mxu0
      %247 = vst [vmem:[%s143] sm:$0xff] %v237
      %248 = vst [vmem:[%s143 + $0x8] sm:$0xff] %v239
      %249 = vst [vmem:[%s143 + $0x10] sm:$0xff] %v243
      %250 = vst [vmem:[%s143 + $0x18] sm:$0xff] %v245
      %v251 = vadd.f32 %v237, %v239
      %252 = vadd.xlane.f32.xlu0 %v251
      %v253 = vpop.xlane.xlu0 %252
      %v254 = vadd.f32 %v243, %v245
      %255 = vadd.xlane.f32.xlu0 %v254
      %v256 = vpop.xlane.xlu0 %255
      %v257 = vmul.f32 %v237, %v237
      %v258 = vmul.f32 %v239, %v239
      %v259 = vmul.f32 %v243, %v243
      %v260 = vmul.f32 %v245, %v245
      %v261 = vadd.f32 %v257, %v258
      %262 = vadd.xlane.f32.xlu0 %v261
      %v263 = vpop.xlane.xlu0 %262
      %v264 = vadd.f32 %v259, %v260
      %265 = vadd.xlane.f32.xlu0 %v264
      %v266 = vpop.xlane.xlu0 %265
      %v268 = vrot.slane %v253, 4
      %v270 = vadd.f32 %v253, %v268
      %v271 = vadd.f32 %v270, %v256
      %v273 = vrot.slane %v256, 4
      %v275 = vadd.f32 %v271, %v273
      %v277 = vrot.slane %v263, 4
      %v279 = vadd.f32 %v263, %v277
      %v280 = vadd.f32 %v279, %v266
      %v282 = vrot.slane %v266, 4
      %v284 = vadd.f32 %v280, %v282
      %v285 = vmul.f32 %v275, 0.0009765625
      %v286 = vmul.f32 %v284, 0.0009765625
      %v287 = vmul.f32 %v285, %v285
      %v288 = vsub.f32 %v286, %v287
      %v289 = vadd.f32 %v288, 1e-05
      %v290 = vrsqrt.pop %v289
      %v292 = vrot.slane %v285, 4
      %v294 = vsel %vm163, %v285, %v292
      %v296 = vrot.slane %v290, 4
      %v298 = vsel %vm163, %v290, %v296
      %v299 = vld [vmem:[%s143] sm:$0xff]
      %v300 = vld [vmem:[%s143 + $0x8] sm:$0xff]
      %v301 = vld [vmem:[%s143 + $0x10] sm:$0xff]
      %v302 = vld [vmem:[%s143 + $0x18] sm:$0xff]
      %304 = vset.pattern.permute.xlu0 0
      %305 = vperm.xlu0 %304, %v294
      %v306 = vpop.permute.xlu0 %305
      %v308 = vsub.f32 %v299, %v306
      %v309 = vsub.f32 %v300, %v306
      %v310 = vsub.f32 %v301, %v306
      %v311 = vsub.f32 %v302, %v306
      %313 = vset.pattern.permute.xlu0 0
      %314 = vperm.xlu0 %313, %v298
      %v315 = vpop.permute.xlu0 %314
      %v317 = vmul.f32 %v308, %v315
      %v318 = vmul.f32 %v309, %v315
      %v319 = vmul.f32 %v310, %v315
      %v320 = vmul.f32 %v311, %v315
      %v321 = vmax.f32 %v317, 0.0
      %v322 = vmax.f32 %v318, 0.0
      %v323 = vmax.f32 %v319, 0.0
      %v324 = vmax.f32 %v320, 0.0
      %325 = vst [vmem:[%s143] sm:$0xff] %v321
      %326 = vst [vmem:[%s143 + $0x8] sm:$0xff] %v322
      %327 = vst [vmem:[%s143 + $0x10] sm:$0xff] %v323
      %328 = vst [vmem:[%s143 + $0x18] sm:$0xff] %v324
      %p329 = scmp.lt.s32.totalorder %s13, 1
      %s330 = scalar_select %p329, %s13, 1
      %s331 = smul.addr %s330, 4
      %s332 = smul.addr %s331, 8
      %s333 = scalar_lea.vmem %s2, %s332
      // Predicated region
      $region29: #{upconv_block.1} parent=27 // pred_check
        %p334 = pneg %p78
      $region30: #{upconv_block.1} parent=27 // pred_check_branch
        %336 = sbr.rel (%p334) target = $region32
      $region31: #{upconv_block.1} parent=27 // pred_region
        _
      $region32: #{upconv_block.1} parent=27 // pred_fallthru
        _
    $region28: #{upconv_block.1} parent=5 // pred_fallthru
      _
    %p337 = scmp.le.s32.totalorder 2, %s8
    // Predicated region
    $region33: #{upconv_block.1} parent=5 // pred_check
      %p338 = pneg %p337
    $region34: #{upconv_block.1} parent=5 // pred_check_branch
      %340 = sbr.rel (%p338) target = $region36
    $region35: #{upconv_block.1} parent=5 // pred_region
      %s341 = ssub.s32 %s8, 2
      // Predicated region
      $region37: #{upconv_block.1} parent=35 // pred_check
        %p342 = pneg %p84
      $region38: #{upconv_block.1} parent=35 // pred_check_branch
        %344 = sbr.rel (%p342) target = $region40
      $region39: #{upconv_block.1} parent=35 // pred_region
        %p345 = scmp.lt.s32.totalorder %s14, 1
        %s346 = scalar_select %p345, %s14, 1
        %s347 = smul.addr %s346, 4
        %s348 = smul.addr %s347, 8
        %s349 = scalar_lea.vmem %s2, %s348
      $region40: #{upconv_block.1} parent=35 // pred_fallthru
        _
    $region36: #{upconv_block.1} parent=5 // pred_fallthru
      _
  $region6: #{upconv_block.1} parent=0 // loop_footer
    %s12 = sadd.s32 1, %s8
  $region7: #{upconv_block.1} parent=0 // loop_footer_branch
    %7 = sbr.rel target = $region3
  $region8: #{upconv_block.1} parent=0 // loop_exit
    _

</llo_original>
